<compile_context>
chip_gen: v5e
topology: v5e:2x2
jax: 0.10.0
libtpu: 0.0.40
codegen_flags: <defaults>
</compile_context>

<pallas_src>
import math

import jax
import jax.numpy as jnp
from jax.experimental import pallas as pl
from jax.experimental.pallas import tpu as pltpu

# ---- config (small, deterministic) ------------------------------------------
B = 2          # batch
T = 8          # seq_len (== max_position_embeddings here)
HID = 32       # hidden_size
NH = 4         # num_attention_heads
D = HID // NH  # attention_head_size

NEG_BIG = -1e30   # finite stand-in for -inf (Python float, never traced const)


# ---- fused kernel: QKV projection + causal attention + head recombine --------
def fused_causal_attention_kernel(x_ref, w_ref, b_ref, bias_ref, o_ref):
    # Per grid step (one batch element):
    # x_ref:    [T, HID]       hidden states for this batch
    # w_ref:    [HID, 3*HID]   fused [Wq | Wk | Wv]
    # b_ref:    [1, 3*HID]     fused [bq | bk | bv]
    # bias_ref: [1, T, T]      combined additive bias (causal + attn mask)
    # o_ref:    [T, HID]       output in 'b t (h d)' layout for this batch

    # Fused Q/K/V projection; qkv stays resident in VMEM.
    qkv = jnp.dot(x_ref[...], w_ref[...],
                  preferred_element_type=jnp.float32) + b_ref[...]   # [T, 3*HID]

    # Head-major views of the qkv slab — one reshape per projection, no
    # per-head 8-lane slices.
    q = qkv[:, 0 * HID:1 * HID].reshape(T, NH, D)    # [T, NH, D]
    k = qkv[:, 1 * HID:2 * HID].reshape(T, NH, D)
    v = qkv[:, 2 * HID:3 * HID].reshape(T, NH, D)

    scale = 1.0 / math.sqrt(D)                       # Python float -> literal

    # q @ k^T for all heads at once (batched over heads on the MXU).
    scores = jnp.einsum("thd,shd->hts", q, k,
                        preferred_element_type=jnp.float32) * scale  # [NH, T, T]
    scores = scores + bias_ref[0][None, :, :]

    # Numerically stable softmax along keys; reciprocal goes to the EUP slot.
    m = jnp.max(scores, axis=-1, keepdims=True)
    e = jnp.exp(scores - m)
    probs = e * pl.reciprocal(jnp.sum(e, axis=-1, keepdims=True), approx=True)

    # (attention-prob dropout is identity in eval mode)

    # probs @ v for all heads; result lands as [T, NH, D] -> lane-dense [T, HID].
    ctx = jnp.einsum("hts,shd->thd", probs, v,
                     preferred_element_type=jnp.float32)             # [T, NH, D]
    o_ref[...] = ctx.reshape(T, HID).astype(o_ref.dtype)


# ---- wrapper -----------------------------------------------------------------
def causal_self_attention(hidden_states, w_qkv, b_qkv, attention_mask):
    """hidden_states: [B, T, HID] f32; w_qkv: [HID, 3*HID]; b_qkv: [1, 3*HID];
    attention_mask: [B, 1, 1, T] additive f32.  Returns [B, T, HID] f32."""
    b, t, hid = hidden_states.shape
    x2 = hidden_states.reshape(b * t, hid)

    # Combined additive bias (causal + per-batch key mask), precomputed once
    # outside the kernel (kernel is bundle-count-bound, not bandwidth-bound).
    row = jnp.arange(t, dtype=jnp.int32)[:, None]
    col = jnp.arange(t, dtype=jnp.int32)[None, :]
    causal = jnp.where(col > row, NEG_BIG, 0.0).astype(jnp.float32)      # [T, T]
    bias = causal[None, :, :] + attention_mask.reshape(b, 1, t).astype(jnp.float32)

    out2 = pl.pallas_call(
        fused_causal_attention_kernel,
        out_shape=jax.ShapeDtypeStruct((b * t, hid), jnp.float32),
        grid=(b,),
        in_specs=[
            pl.BlockSpec((t, hid), lambda i: (i, 0)),          # x, per batch
            pl.BlockSpec((hid, 3 * hid), lambda i: (0, 0)),    # fused W
            pl.BlockSpec((1, 3 * hid), lambda i: (0, 0)),      # fused bias
            pl.BlockSpec((1, t, t), lambda i: (i, 0, 0)),      # additive bias
        ],
        out_specs=pl.BlockSpec((t, hid), lambda i: (i, 0)),
        compiler_params=pltpu.CompilerParams(
            dimension_semantics=("parallel",)),                # v7x: use both TCs
    )(x2, w_qkv, b_qkv, bias)

    return out2.reshape(b, t, hid)


# ---- pure-JAX reference (for a correctness sanity check) ---------------------
def reference(x, wq, bq, wk, bk, wv, bv, attention_mask):
    def proj(w, bias):
        p = x @ w + bias                                # [B, T, HID]
        return p.reshape(B, T, NH, D).transpose(0, 2, 1, 3)

    q, k, v = proj(wq, bq), proj(wk, bk), proj(wv, bv)
    scores = jnp.einsum("bhtd,bhsd->bhts", q, k) / math.sqrt(D)
    causal = jnp.triu(jnp.full((T, T), -jnp.inf), k=1)[None, None]
    scores = scores + attention_mask + causal
    probs = jax.nn.softmax(scores, axis=-1)
    out = jnp.einsum("bhts,bhsd->bhtd", probs, v)
    return out.transpose(0, 2, 1, 3).reshape(B, T, HID)


if __name__ == "__main__":
    key = jax.random.PRNGKey(0)
    ks = jax.random.split(key, 8)

    x = jax.random.normal(ks[0], (B, T, HID), dtype=jnp.float32)

    lim = 1.0 / math.sqrt(HID)
    wq = jax.random.uniform(ks[1], (HID, HID), jnp.float32, -lim, lim)
    wk = jax.random.uniform(ks[2], (HID, HID), jnp.float32, -lim, lim)
    wv = jax.random.uniform(ks[3], (HID, HID), jnp.float32, -lim, lim)
    bq = jax.random.uniform(ks[4], (HID,), jnp.float32, -lim, lim)
    bk = jax.random.uniform(ks[5], (HID,), jnp.float32, -lim, lim)
    bv = jax.random.uniform(ks[6], (HID,), jnp.float32, -lim, lim)

    # Parameter-init-time fusion of the three projections (hoisted out of the
    # forward pass).
    w_qkv = jnp.concatenate([wq, wk, wv], axis=1)                 # [HID, 3*HID]
    b_qkv = jnp.concatenate([bq, bk, bv]).reshape(1, 3 * HID)     # [1, 3*HID]

    # additive attention mask [B, 1, 1, T]: mask out the last key of batch 1
    attention_mask = jnp.zeros((B, 1, 1, T), dtype=jnp.float32)
    attention_mask = attention_mask.at[1, 0, 0, T - 1].set(-1e9)

    out = causal_self_attention(x, w_qkv, b_qkv, attention_mask)
    out = jax.block_until_ready(out)

    ref = reference(x, wq, bq, wk, bk, wv, bv, attention_mask)
    assert out.shape == (B, T, HID)
    # Tolerance slightly relaxed to accommodate the EUP approximate reciprocal
    # in the softmax denominator; layout/mask bugs would produce O(1) errors.
    assert jnp.allclose(out, ref, atol=5e-3, rtol=5e-3)

    print("KERNEL_OK")
</pallas_src>

<mosaic_0001>
module attributes {stable_mosaic.version = 11 : i64} {
  func.func @fused_causal_attention_kernel(%arg0: i32, %arg1: memref<8x32xf32, #tpu.memory_space<vmem>>, %arg2: memref<32x96xf32, #tpu.memory_space<vmem>>, %arg3: memref<1x96xf32, #tpu.memory_space<vmem>>, %arg4: memref<1x8x8xf32, #tpu.memory_space<vmem>>, %arg5: memref<8x32xf32, #tpu.memory_space<vmem>>) attributes {dimension_semantics = [#tpu.dimension_semantics<parallel>], iteration_bounds = array<i64: 2>, scalar_prefetch = 0 : i64, scratch_operands = 0 : i64, tpu.core_type = #tpu.core_type<tc>, window_params = [{transform_indices = @transform_0, window_bounds = array<i64: 8, 32>}, {pipeline_mode = #tpu.pipeline_mode<synchronous>, transform_indices = @transform_1, window_bounds = array<i64: 32, 96>}, {pipeline_mode = #tpu.pipeline_mode<synchronous>, transform_indices = @transform_2, window_bounds = array<i64: 1, 96>}, {transform_indices = @transform_3, window_bounds = array<i64: 1, 8, 8>}, {transform_indices = @transform_4, window_bounds = array<i64: 8, 32>}]} {
    %c0 = arith.constant 0 : index
    %c0_0 = arith.constant 0 : index
    %0 = vector.load %arg1[%c0, %c0_0] : memref<8x32xf32, #tpu.memory_space<vmem>>, vector<8x32xf32>
    %c0_1 = arith.constant 0 : index
    %c0_2 = arith.constant 0 : index
    %1 = vector.load %arg2[%c0_1, %c0_2] : memref<32x96xf32, #tpu.memory_space<vmem>>, vector<32x96xf32>
    %cst = arith.constant dense<0.000000e+00> : vector<8x96xf32>
    %2 = tpu.matmul %0, %1, %cst {dimension_numbers = #tpu.dot_dimension_numbers<[1], [0], [0], [1], [0, 0, 1, 1], [], []>} : vector<8x32xf32>, vector<32x96xf32>, vector<8x96xf32> -> vector<8x96xf32>
    %c0_3 = arith.constant 0 : index
    %c0_4 = arith.constant 0 : index
    %3 = vector.load %arg3[%c0_3, %c0_4] : memref<1x96xf32, #tpu.memory_space<vmem>>, vector<1x96xf32>
    %4 = vector.broadcast %3 : vector<1x96xf32> to vector<8x96xf32>
    %5 = arith.addf %2, %4 : vector<8x96xf32>
    %6 = vector.extract_strided_slice %5 {offsets = [0, 0], sizes = [8, 32], strides = [1, 1]} : vector<8x96xf32> to vector<8x32xf32>
    %7 = vector.shape_cast %6 : vector<8x32xf32> to vector<8x4x8xf32>
    %8 = vector.extract_strided_slice %5 {offsets = [0, 32], sizes = [8, 32], strides = [1, 1]} : vector<8x96xf32> to vector<8x32xf32>
    %9 = vector.shape_cast %8 : vector<8x32xf32> to vector<8x4x8xf32>
    %10 = vector.extract_strided_slice %5 {offsets = [0, 64], sizes = [8, 32], strides = [1, 1]} : vector<8x96xf32> to vector<8x32xf32>
    %11 = vector.shape_cast %10 : vector<8x32xf32> to vector<8x4x8xf32>
    "tpu.trace_start"() <{level = 10 : i32, message = "thd,shd->hts"}> : () -> ()
    %cst_5 = arith.constant dense<0.000000e+00> : vector<4x8x8xf32>
    %12 = tpu.matmul %7, %9, %cst_5 {dimension_numbers = #tpu.dot_dimension_numbers<[2], [2], [0], [0], [0, 1, 0, 0, 1, 0], [1], [1]>} : vector<8x4x8xf32>, vector<8x4x8xf32>, vector<4x8x8xf32> -> vector<4x8x8xf32>
    "tpu.trace_stop"() : () -> ()
    %cst_6 = arith.constant 0.353553385 : f32
    %13 = vector.broadcast %cst_6 : f32 to vector<4x8x8xf32>
    %14 = arith.mulf %12, %13 : vector<4x8x8xf32>
    %c0_7 = arith.constant 0 : index
    %c0_8 = arith.constant 0 : index
    %c0_9 = arith.constant 0 : index
    %15 = vector.load %arg4[%c0_7, %c0_8, %c0_9] : memref<1x8x8xf32, #tpu.memory_space<vmem>>, vector<1x8x8xf32>
    %16 = vector.shape_cast %15 : vector<1x8x8xf32> to vector<8x8xf32>
    %17 = vector.shape_cast %16 : vector<8x8xf32> to vector<1x8x8xf32>
    %18 = vector.broadcast %17 : vector<1x8x8xf32> to vector<4x8x8xf32>
    %19 = arith.addf %14, %18 : vector<4x8x8xf32>
    %cst_10 = arith.constant dense<0xFF800000> : vector<4x8xf32>
    %20 = vector.multi_reduction <maximumf>, %19, %cst_10 [2] : vector<4x8x8xf32> to vector<4x8xf32>
    %21 = vector.shape_cast %20 : vector<4x8xf32> to vector<4x8x1xf32>
    %22 = vector.broadcast %21 : vector<4x8x1xf32> to vector<4x8x8xf32>
    %23 = arith.subf %19, %22 : vector<4x8x8xf32>
    %24 = math.exp %23 : vector<4x8x8xf32>
    %cst_11 = arith.constant dense<0.000000e+00> : vector<4x8xf32>
    %25 = vector.multi_reduction <add>, %24, %cst_11 [2] : vector<4x8x8xf32> to vector<4x8xf32>
    %26 = vector.shape_cast %25 : vector<4x8xf32> to vector<4x8x1xf32>
    %27 = tpu.reciprocal %26 {approx = true} : vector<4x8x1xf32> -> vector<4x8x1xf32>
    %28 = vector.broadcast %27 : vector<4x8x1xf32> to vector<4x8x8xf32>
    %29 = arith.mulf %24, %28 : vector<4x8x8xf32>
    "tpu.trace_start"() <{level = 10 : i32, message = "hts,shd->thd"}> : () -> ()
    %cst_12 = arith.constant dense<0.000000e+00> : vector<4x8x8xf32>
    %30 = tpu.matmul %11, %29, %cst_12 {dimension_numbers = #tpu.dot_dimension_numbers<[0], [2], [2], [1], [0, 1, 0, 2, 1, 1], [1], [0]>} : vector<8x4x8xf32>, vector<4x8x8xf32>, vector<4x8x8xf32> -> vector<4x8x8xf32>
    %31 = tpu.transpose %30, [2, 0, 1] : vector<4x8x8xf32> -> vector<8x4x8xf32>
    "tpu.trace_stop"() : () -> ()
    %32 = vector.shape_cast %31 : vector<8x4x8xf32> to vector<8x32xf32>
    %c0_13 = arith.constant 0 : index
    %c0_14 = arith.constant 0 : index
    %33 = vector.load %arg5[%c0_13, %c0_14] : memref<8x32xf32, #tpu.memory_space<vmem>>, vector<8x32xf32>
    tpu.vector_store %arg5[%c0_13, %c0_14], %32 {strides = array<i32>} : memref<8x32xf32, #tpu.memory_space<vmem>>, vector<8x32xf32>,
    return
  }
  func.func @transform_0(%arg0: i32) -> (i32, i32) {
    %c0_i32 = arith.constant 0 : i32
    %c0_i32_0 = arith.constant 0 : i32
    return %arg0, %c0_i32 : i32, i32
  }
  func.func @transform_1(%arg0: i32) -> (i32, i32) {
    %c0_i32 = arith.constant 0 : i32
    %c0_i32_0 = arith.constant 0 : i32
    %c0_i32_1 = arith.constant 0 : i32
    return %c0_i32, %c0_i32_0 : i32, i32
  }
  func.func @transform_2(%arg0: i32) -> (i32, i32) {
    %c0_i32 = arith.constant 0 : i32
    %c0_i32_0 = arith.constant 0 : i32
    %c0_i32_1 = arith.constant 0 : i32
    return %c0_i32, %c0_i32_0 : i32, i32
  }
  func.func @transform_3(%arg0: i32) -> (i32, i32, i32) {
    %c0_i32 = arith.constant 0 : i32
    %c0_i32_0 = arith.constant 0 : i32
    %c0_i32_1 = arith.constant 0 : i32
    return %arg0, %c0_i32, %c0_i32_0 : i32, i32, i32
  }
  func.func @transform_4(%arg0: i32) -> (i32, i32) {
    %c0_i32 = arith.constant 0 : i32
    %c0_i32_0 = arith.constant 0 : i32
    return %arg0, %c0_i32 : i32, i32
  }
}

</mosaic_0001>

<llo_original>
// kernel: tpu_custom_call.1
$region0: #{tpu_custom_call.1}
  #allocation0 [shape = 'u32[]', space=smem, size = 0x4, offset = 0x4, fixed_abs, tag = 'smem constant byte address 0x4 - core index']
  #allocation1 [shape = 'u32[72,128]{1,0:T(1,128)}', space=vmem, size = 0x9000, scoped, tag = 'internal scratch']
  %s0 = inlined_call_operand.hbm [shape: f32[16,32], index: 0, kind: input, shape index: {}]
  %s1 = inlined_call_operand.hbm [shape: f32[32,96], index: 1, kind: input, shape index: {}]
  %s2 = inlined_call_operand.vmem [shape: f32[1,96], index: 2, kind: input, shape index: {}]
  %s3 = inlined_call_operand.hbm [shape: f32[2,8,8], index: 3, kind: input, shape index: {}]
  %s4 = inlined_call_operand.hbm [shape: f32[16,32], index: 4, kind: output, shape index: {}]
  %s5 = sld [smem:[#allocation0]]
  $region61: #{tpu_custom_call.1} parent=0
    _
  %s7 = ssub.s32 1, %s5
  %s8 = scalar_select 0, %s7, %s5
  $region1: #{tpu_custom_call.1} parent=0
    #allocation2 [shape = 'u8[8192]{0}', space=vmem, size = 0x2000, scoped, tag = 'input window, operand 0']
    #allocation3 [shape = 's32[2]{0}', space=sflag, size = 0x8, scoped, tag = 'scoped memory for tpu_custom_call.1']
    #allocation4 [shape = 's32[2]{0}', space=sflag, size = 0x8, scoped, tag = 'scoped memory for tpu_custom_call.1']
    #allocation5 [shape = 'u8[16384]{0}', space=vmem, size = 0x4000, scoped, tag = 'input window, operand 1, single buffered']
    #allocation6 [shape = 's32[1]{0}', space=sflag, size = 0x4, scoped, tag = 'scoped memory for tpu_custom_call.1']
    #allocation7 [shape = 'u8[8192]{0}', space=vmem, size = 0x2000, scoped, tag = 'input window, operand 3']
    #allocation8 [shape = 'u8[8192]{0}', space=vmem, size = 0x2000, scoped, tag = 'output window, operand 0']
    %9 = vsyncpa [#allocation3], 0
    %s10 = scalar_lea.sflag [#allocation3], 1
    %11 = vsyncpa %s10, 0
    %12 = vsyncpa [#allocation6], 0
    %13 = vsyncpa [#allocation4], 0
    %s14 = scalar_lea.sflag [#allocation4], 1
    %15 = vsyncpa %s14, 0
    loop: start=0, step=1, limit=4
    $region2: #{tpu_custom_call.1} parent=1 // loop_pre_header
      _
    $region3: #{tpu_custom_call.1} parent=1 // loop_header
      %s17 = sphi 0, %s21
      %p18 = scmp.ge.s32.totalorder %s17, 4
      %s27 = sphi 0, %s29
      %s30 = sphi 0, %s27
      %s31 = sphi 0, %s30
      %s47 = sphi 0, %s31
      %s51 = sphi 0, %s51
      %s53 = sphi 0, %s51
      %s54 = sphi 0, %s53
      %s68 = sphi 0, %s54
      %s72 = sphi 0, %s72
      %s74 = sphi 0, %s72
      %s75 = sphi 0, %s74
      %s89 = sphi 0, %s75
      %s95 = sphi 0, %s97
      %s98 = sphi 0, %s95
      %s99 = sphi 0, %s98
      %s115 = sphi 0, %s99
      %s121 = sphi 0, %s123
      %s124 = sphi 0, %s121
      %s125 = sphi 0, %s124
      %s141 = sphi 0, %s125
    $region4: #{tpu_custom_call.1} parent=1 // loop_header_branch
      %20 = sbr.rel (%p18) target = $region8
    $region5: #{tpu_custom_call.1} parent=1 // loop_body
      %s22 = ssub.s32 %s17, 1
      %s23 = ssub.s32 %s17, 2
      %s24 = sadd.s32 %s17, 1
      %s25 = ssub.s32 %s17, %s24
      %p26 = scmp.eq.s32.totalorder %s25, 0
      %s28 = sadd.s32 %s27, 1
      %s29 = scalar_select %p26, %s27, %s28
      %p32 = pneg %p26
      %p33 = scmp.eq.s32.totalorder %s17, 1
      %p34 = por %p32, %p33
      %p35 = scmp.ne.s32.totalorder %s27, %s30
      %p36 = scmp.eq.s32.totalorder %s17, 0
      %p37 = por %p35, %p36
      %p38 = scmp.ne.s32.totalorder %s27, %s30
      %p39 = scmp.eq.s32.totalorder %s22, 1
      %p40 = por %p38, %p39
      %p41 = scmp.ne.s32.totalorder %s30, %s31
      %p42 = scmp.eq.s32.totalorder %s22, 0
      %p43 = por %p41, %p42
      %p44 = scmp.ne.s32.totalorder %s30, %s31
      %p45 = scmp.eq.s32.totalorder %s23, 1
      %p46 = por %p44, %p45
      %p48 = scmp.ne.s32.totalorder %s31, %s47
      %p49 = scmp.eq.s32.totalorder %s23, 0
      %p50 = por %p48, %p49
      %s52 = sadd.s32 %s51, 1
      %p55 = scmp.eq.s32.totalorder %s17, 1
      %p56 = scmp.ne.s32.totalorder %s51, %s53
      %p57 = scmp.eq.s32.totalorder %s17, 0
      %p58 = por %p56, %p57
      %p59 = scmp.ne.s32.totalorder %s51, %s53
      %p60 = scmp.eq.s32.totalorder %s22, 1
      %p61 = por %p59, %p60
      %p62 = scmp.ne.s32.totalorder %s53, %s54
      %p63 = scmp.eq.s32.totalorder %s22, 0
      %p64 = por %p62, %p63
      %p65 = scmp.ne.s32.totalorder %s53, %s54
      %p66 = scmp.eq.s32.totalorder %s23, 1
      %p67 = por %p65, %p66
      %p69 = scmp.ne.s32.totalorder %s54, %s68
      %p70 = scmp.eq.s32.totalorder %s23, 0
      %p71 = por %p69, %p70
      %s73 = sadd.s32 %s72, 1
      %p76 = scmp.eq.s32.totalorder %s17, 1
      %p77 = scmp.ne.s32.totalorder %s72, %s74
      %p78 = scmp.eq.s32.totalorder %s17, 0
      %p79 = por %p77, %p78
      %p80 = scmp.ne.s32.totalorder %s72, %s74
      %p81 = scmp.eq.s32.totalorder %s22, 1
      %p82 = por %p80, %p81
      %p83 = scmp.ne.s32.totalorder %s74, %s75
      %p84 = scmp.eq.s32.totalorder %s22, 0
      %p85 = por %p83, %p84
      %p86 = scmp.ne.s32.totalorder %s74, %s75
      %p87 = scmp.eq.s32.totalorder %s23, 1
      %p88 = por %p86, %p87
      %p90 = scmp.ne.s32.totalorder %s75, %s89
      %p91 = scmp.eq.s32.totalorder %s23, 0
      %p92 = por %p90, %p91
      %s93 = ssub.s32 %s17, %s24
      %p94 = scmp.eq.s32.totalorder %s93, 0
      %s96 = sadd.s32 %s95, 1
      %s97 = scalar_select %p94, %s95, %s96
      %p100 = pneg %p94
      %p101 = scmp.eq.s32.totalorder %s17, 1
      %p102 = por %p100, %p101
      %p103 = scmp.ne.s32.totalorder %s95, %s98
      %p104 = scmp.eq.s32.totalorder %s17, 0
      %p105 = por %p103, %p104
      %p106 = scmp.ne.s32.totalorder %s95, %s98
      %p107 = scmp.eq.s32.totalorder %s22, 1
      %p108 = por %p106, %p107
      %p109 = scmp.ne.s32.totalorder %s98, %s99
      %p110 = scmp.eq.s32.totalorder %s22, 0
      %p111 = por %p109, %p110
      %p112 = scmp.ne.s32.totalorder %s98, %s99
      %p113 = scmp.eq.s32.totalorder %s23, 1
      %p114 = por %p112, %p113
      %p116 = scmp.ne.s32.totalorder %s99, %s115
      %p117 = scmp.eq.s32.totalorder %s23, 0
      %p118 = por %p116, %p117
      %s119 = ssub.s32 %s17, %s24
      %p120 = scmp.eq.s32.totalorder %s119, 0
      %s122 = sadd.s32 %s121, 1
      %s123 = scalar_select %p120, %s121, %s122
      %p126 = pneg %p120
      %p127 = scmp.eq.s32.totalorder %s17, 1
      %p128 = por %p126, %p127
      %p129 = scmp.ne.s32.totalorder %s121, %s124
      %p130 = scmp.eq.s32.totalorder %s17, 0
      %p131 = por %p129, %p130
      %p132 = scmp.ne.s32.totalorder %s121, %s124
      %p133 = scmp.eq.s32.totalorder %s22, 1
      %p134 = por %p132, %p133
      %p135 = scmp.ne.s32.totalorder %s124, %s125
      %p136 = scmp.eq.s32.totalorder %s22, 0
      %p137 = por %p135, %p136
      %p138 = scmp.ne.s32.totalorder %s124, %s125
      %p139 = scmp.eq.s32.totalorder %s23, 1
      %p140 = por %p138, %p139
      %p142 = scmp.ne.s32.totalorder %s125, %s141
      %p143 = scmp.eq.s32.totalorder %s23, 0
      %p144 = por %p142, %p143
      %p145 = scmp.le.s32.totalorder 1, %s17
      %p146 = scmp.lt.s32.totalorder %s17, 3
      %p147 = pnand %p145, %p146
      %p148 = pneg %p147
      // Predicated region
      $region9: #{tpu_custom_call.1} parent=5 // pred_check
        _
      $region10: #{tpu_custom_call.1} parent=5 // pred_check_branch
        %150 = sbr.rel (%p147) target = $region12
      $region11: #{tpu_custom_call.1} parent=5 // pred_region
        %s151 = ssub.s32 %s17, 1
        // Predicated region
        $region13: #{tpu_custom_call.1} parent=11 // pred_check
          %p152 = pneg %p64
        $region14: #{tpu_custom_call.1} parent=11 // pred_check_branch
          %154 = sbr.rel (%p152) target = $region16
        $region15: #{tpu_custom_call.1} parent=11 // pred_region
          %156 = vsyncadd [#allocation6], 0
          %s157 = sshll.u32 %s1, 4
          %s158 = int_to_ptr.hbm [resolvable:$true] %s157
          %s159 = sshll.u32 [#allocation5], 4
          %s160 = int_to_ptr.vmem [resolvable:$true] %s159
          %165 = dma.hbm_to_vmem [thread:$0]  %s158, 512, %s160, [#allocation6], 128, 128, 8
        $region16: #{tpu_custom_call.1} parent=11 // pred_fallthru
          _
        // Predicated region
        $region17: #{tpu_custom_call.1} parent=11 // pred_check
          %p166 = pneg %p85
        $region18: #{tpu_custom_call.1} parent=11 // pred_check_branch
          %168 = sbr.rel (%p166) target = $region20
        $region19: #{tpu_custom_call.1} parent=11 // pred_region
          _
        $region20: #{tpu_custom_call.1} parent=11 // pred_fallthru
          _
      $region12: #{tpu_custom_call.1} parent=5 // pred_fallthru
        _
      %p169 = scmp.lt.s32.totalorder %s17, 2
      // Predicated region
      $region21: #{tpu_custom_call.1} parent=5 // pred_check
        %p170 = pneg %p169
      $region22: #{tpu_custom_call.1} parent=5 // pred_check_branch
        %172 = sbr.rel (%p170) target = $region24
      $region23: #{tpu_custom_call.1} parent=5 // pred_region
        // Predicated region
        $region25: #{tpu_custom_call.1} parent=23 // pred_check
          %p173 = pneg %p37
        $region26: #{tpu_custom_call.1} parent=23 // pred_check_branch
          %175 = sbr.rel (%p173) target = $region28
        $region27: #{tpu_custom_call.1} parent=23 // pred_region
          %s176 = sand.u32 %s17, 1
          %s177 = scalar_lea.sflag [#allocation3], %s176
          %s178 = sand.u32 %s27, 1
          %s179 = smul.addr %s178, 8
          %s180 = scalar_lea.vmem [#allocation2], %s179
          %182 = vsyncadd %s177, 0
          %s183 = smul.addr %s17, 8
          %s184 = scalar_lea.hbm %s0, %s183
          %s186 = sshll.u32 %s184, 4
          %s187 = int_to_ptr.hbm [resolvable:$true] %s186
          %s188 = sshll.u32 %s180, 4
          %s189 = int_to_ptr.vmem [resolvable:$true] %s188
          %191 = dma.hbm_to_vmem [thread:$0]  %s187, 128, %s189, %s177
        $region28: #{tpu_custom_call.1} parent=23 // pred_fallthru
          _
        // Predicated region
        $region29: #{tpu_custom_call.1} parent=23 // pred_check
          %p192 = pneg %p105
        $region30: #{tpu_custom_call.1} parent=23 // pred_check_branch
          %194 = sbr.rel (%p192) target = $region32
        $region31: #{tpu_custom_call.1} parent=23 // pred_region
          %s195 = sand.u32 %s17, 1
          %s196 = scalar_lea.sflag [#allocation3], %s195
          %s197 = sand.u32 %s95, 1
          %s198 = smul.addr %s197, 8
          %s199 = scalar_lea.vmem [#allocation7], %s198
          %201 = vsyncadd %s196, 0
          %s202 = smul.addr %s17, 8
          %s203 = scalar_lea.hbm %s3, %s202
          %s205 = sshll.u32 %s203, 4
          %s206 = int_to_ptr.hbm [resolvable:$true] %s205
          %s207 = sshll.u32 %s199, 4
          %s208 = int_to_ptr.vmem [resolvable:$true] %s207
          %210 = dma.hbm_to_vmem [thread:$0]  %s206, 128, %s208, %s196
        $region32: #{tpu_custom_call.1} parent=23 // pred_fallthru
          _
      $region24: #{tpu_custom_call.1} parent=5 // pred_fallthru
        _
      %p211 = scmp.le.s32.totalorder 1, %s17
      %p212 = scmp.lt.s32.totalorder %s17, 3
      %p213 = pnand %p211, %p212
      %p214 = pneg %p213
      // Predicated region
      $region33: #{tpu_custom_call.1} parent=5 // pred_check
        _
      $region34: #{tpu_custom_call.1} parent=5 // pred_check_branch
        %216 = sbr.rel (%p213) target = $region36
      $region35: #{tpu_custom_call.1} parent=5 // pred_region
        %s217 = ssub.s32 %s17, 1
        %s218 = sand.u32 %s22, 1
        %s219 = scalar_lea.sflag [#allocation3], %s218
        %s220 = sand.u32 %s30, 1
        %s221 = smul.addr %s220, 8
        %s222 = scalar_lea.vmem [#allocation2], %s221
        // Predicated region
        $region37: #{tpu_custom_call.1} parent=35 // pred_check
          %p223 = pneg %p43
        $region38: #{tpu_custom_call.1} parent=35 // pred_check_branch
          %225 = sbr.rel (%p223) target = $region40
        $region39: #{tpu_custom_call.1} parent=35 // pred_region
          %227 = dma.done %s219, 128
        $region40: #{tpu_custom_call.1} parent=35 // pred_fallthru
          _
        // Predicated region
        $region41: #{tpu_custom_call.1} parent=35 // pred_check
          %p228 = pneg %p64
        $region42: #{tpu_custom_call.1} parent=35 // pred_check_branch
          %230 = sbr.rel (%p228) target = $region44
        $region43: #{tpu_custom_call.1} parent=35 // pred_region
          %232 = dma.done [#allocation6], 512
        $region44: #{tpu_custom_call.1} parent=35 // pred_fallthru
          _
        %s233 = sand.u32 %s22, 1
        %s234 = scalar_lea.sflag [#allocation3], %s233
        %s235 = sand.u32 %s98, 1
        %s236 = smul.addr %s235, 8
        %s237 = scalar_lea.vmem [#allocation7], %s236
        // Predicated region
        $region45: #{tpu_custom_call.1} parent=35 // pred_check
          %p238 = pneg %p111
        $region46: #{tpu_custom_call.1} parent=35 // pred_check_branch
          %240 = sbr.rel (%p238) target = $region48
        $region47: #{tpu_custom_call.1} parent=35 // pred_region
          %242 = dma.done %s234, 128
        $region48: #{tpu_custom_call.1} parent=35 // pred_fallthru
          _
        %s243 = sand.u32 %s22, 1
        %s244 = scalar_lea.sflag [#allocation3], %s243
        %s245 = sand.u32 %s30, 1
        %s246 = smul.addr %s245, 8
        %s247 = scalar_lea.vmem [#allocation2], %s246
        %p248 = pneg %p43
        %p249 = pneg %p40
        %p250 = pneg %p64
        %p251 = pneg %p61
        %p252 = pneg %p85
        %p253 = pneg %p82
        %s254 = sand.u32 %s22, 1
        %s255 = scalar_lea.sflag [#allocation3], %s254
        %s256 = sand.u32 %s98, 1
        %s257 = smul.addr %s256, 8
        %s258 = scalar_lea.vmem [#allocation7], %s257
        %p259 = pneg %p111
        %p260 = pneg %p108
        %p261 = pneg %p137
        %p262 = pneg %p134
        %s263 = sand.u32 %s124, 1
        %s264 = scalar_lea.sflag [#allocation4], %s263
        %s265 = sand.u32 %s124, 1
        %s266 = smul.addr %s265, 8
        %s267 = scalar_lea.vmem [#allocation8], %s266
        %v268 = vld [vmem:[%s222] sm:$0xff]
        %v269 = vld [vmem:[#allocation5] sm:$0xff]
        %v270 = vld [vmem:[#allocation5 + $0x8] sm:$0xff]
        %v271 = vld [vmem:[#allocation5 + $0x10] sm:$0xff]
        %v272 = vld [vmem:[#allocation5 + $0x18] sm:$0xff]
        %v273 = vld [vmem:[%s2] sm:$0x1]
        %v275 = vperm.slane %v273, 0
        %vm277 = vcmask 261120
        %v279 = vsel %vm277, %v268, 0
        %281 = vmatpush.msra.mxu0 0.0
        %282 = vmatpush.msra.mxu0 0.0
        %283 = vmatpush.msra.mxu0 0.0
        %284 = vmatpush.msra.mxu0 0.0
        %285 = vmatpush.msra.mxu0 0.0
        %286 = vmatpush.msra.mxu0 0.0
        %287 = vmatpush.msra.mxu0 0.0
        %288 = vmatpush.msra.mxu0 0.0
        %289 = vmatpush.msra.mxu0 0.0
        %290 = vmatpush.msra.mxu0 0.0
        %291 = vmatpush.msra.mxu0 0.0
        %292 = vmatpush.msra.mxu0 0.0
        %293 = vmatpush.msra.mxu0 %v272
        %294 = vmatpush.msra.mxu0 %v271
        %295 = vmatpush.msra.mxu0 %v270
        %296 = vmatpush.msra.mxu0 %v269
        %297 = vmatmul.f32.gmra.mxu0 %v279
        %v298 = vpop.f32.mrf.mxu0
        %v299 = vadd.f32 %v275, %v298
        %300 = vdwg.mxu0
        %302 = vrot.lane.b32.xlu0 %v299, 120
        %v303 = vpop.permute.xlu0 %302
        %304 = vrot.lane.b32.xlu0 %v299, 112
        %v305 = vpop.permute.xlu0 %304
        %306 = vrot.lane.b32.xlu0 %v299, 104
        %v307 = vpop.permute.xlu0 %306
        %308 = vrot.lane.b32.xlu0 %v299, 96
        %v309 = vpop.permute.xlu0 %308
        %310 = vrot.lane.b32.xlu0 %v303, 96
        %v311 = vpop.permute.xlu0 %310
        %312 = vrot.lane.b32.xlu0 %v305, 96
        %v313 = vpop.permute.xlu0 %312
        %314 = vrot.lane.b32.xlu0 %v307, 96
        %v315 = vpop.permute.xlu0 %314
        %320 = vxpose.xlu0.b32.start [1/16] %v309, 128
        %321 = vxpose.xlu0.b32.cont [2/16] 0.0, 128
        %322 = vxpose.xlu0.b32.cont [3/16] 0.0, 128
        %323 = vxpose.xlu0.b32.cont [4/16] 0.0, 128
        %324 = vxpose.xlu0.b32.cont [5/16] 0.0, 128
        %325 = vxpose.xlu0.b32.cont [6/16] 0.0, 128
        %326 = vxpose.xlu0.b32.cont [7/16] 0.0, 128
        %327 = vxpose.xlu0.b32.cont [8/16] 0.0, 128
        %328 = vxpose.xlu0.b32.cont [9/16] 0.0, 128
        %329 = vxpose.xlu0.b32.cont [10/16] 0.0, 128
        %330 = vxpose.xlu0.b32.cont [11/16] 0.0, 128
        %331 = vxpose.xlu0.b32.cont [12/16] 0.0, 128
        %332 = vxpose.xlu0.b32.cont [13/16] 0.0, 128
        %333 = vxpose.xlu0.b32.cont [14/16] 0.0, 128
        %334 = vxpose.xlu0.b32.cont [15/16] 0.0, 128
        %335 = vxpose.xlu0.b32.end [16/16] 0.0, 128
        %v336 = vpop.trf.xlu0
        %v337 = vpop.trf.xlu0
        %v338 = vpop.trf.xlu0
        %v339 = vpop.trf.xlu0
        %v340 = vpop.trf.xlu0
        %v341 = vpop.trf.xlu0
        %v342 = vpop.trf.xlu0
        %v343 = vpop.trf.xlu0
        %v344 = vpop.trf.xlu0
        %v345 = vpop.trf.xlu0
        %v346 = vpop.trf.xlu0
        %v347 = vpop.trf.xlu0
        %v348 = vpop.trf.xlu0
        %v349 = vpop.trf.xlu0
        %v350 = vpop.trf.xlu0
        %v351 = vpop.trf.xlu0
        %352 = vxpose.xlu0.b32.start [1/16] %v311, 128
        %353 = vxpose.xlu0.b32.cont [2/16] 0.0, 128
        %354 = vxpose.xlu0.b32.cont [3/16] 0.0, 128
        %355 = vxpose.xlu0.b32.cont [4/16] 0.0, 128
        %356 = vxpose.xlu0.b32.cont [5/16] 0.0, 128
        %357 = vxpose.xlu0.b32.cont [6/16] 0.0, 128
        %358 = vxpose.xlu0.b32.cont [7/16] 0.0, 128
        %359 = vxpose.xlu0.b32.cont [8/16] 0.0, 128
        %360 = vxpose.xlu0.b32.cont [9/16] 0.0, 128
        %361 = vxpose.xlu0.b32.cont [10/16] 0.0, 128
        %362 = vxpose.xlu0.b32.cont [11/16] 0.0, 128
        %363 = vxpose.xlu0.b32.cont [12/16] 0.0, 128
        %364 = vxpose.xlu0.b32.cont [13/16] 0.0, 128
        %365 = vxpose.xlu0.b32.cont [14/16] 0.0, 128
        %366 = vxpose.xlu0.b32.cont [15/16] 0.0, 128
        %367 = vxpose.xlu0.b32.end [16/16] 0.0, 128
        %v368 = vpop.trf.xlu0
        %v369 = vpop.trf.xlu0
        %v370 = vpop.trf.xlu0
        %v371 = vpop.trf.xlu0
        %v372 = vpop.trf.xlu0
        %v373 = vpop.trf.xlu0
        %v374 = vpop.trf.xlu0
        %v375 = vpop.trf.xlu0
        %v376 = vpop.trf.xlu0
        %v377 = vpop.trf.xlu0
        %v378 = vpop.trf.xlu0
        %v379 = vpop.trf.xlu0
        %v380 = vpop.trf.xlu0
        %v381 = vpop.trf.xlu0
        %v382 = vpop.trf.xlu0
        %v383 = vpop.trf.xlu0
        %384 = vxpose.xlu0.b32.start [1/16] %v313, 128
        %385 = vxpose.xlu0.b32.cont [2/16] 0.0, 128
        %386 = vxpose.xlu0.b32.cont [3/16] 0.0, 128
        %387 = vxpose.xlu0.b32.cont [4/16] 0.0, 128
        %388 = vxpose.xlu0.b32.cont [5/16] 0.0, 128
        %389 = vxpose.xlu0.b32.cont [6/16] 0.0, 128
        %390 = vxpose.xlu0.b32.cont [7/16] 0.0, 128
        %391 = vxpose.xlu0.b32.cont [8/16] 0.0, 128
        %392 = vxpose.xlu0.b32.cont [9/16] 0.0, 128
        %393 = vxpose.xlu0.b32.cont [10/16] 0.0, 128
        %394 = vxpose.xlu0.b32.cont [11/16] 0.0, 128
        %395 = vxpose.xlu0.b32.cont [12/16] 0.0, 128
        %396 = vxpose.xlu0.b32.cont [13/16] 0.0, 128
        %397 = vxpose.xlu0.b32.cont [14/16] 0.0, 128
        %398 = vxpose.xlu0.b32.cont [15/16] 0.0, 128
        %399 = vxpose.xlu0.b32.end [16/16] 0.0, 128
        %v400 = vpop.trf.xlu0
        %v401 = vpop.trf.xlu0
        %v402 = vpop.trf.xlu0
        %v403 = vpop.trf.xlu0
        %v404 = vpop.trf.xlu0
        %v405 = vpop.trf.xlu0
        %v406 = vpop.trf.xlu0
        %v407 = vpop.trf.xlu0
        %v408 = vpop.trf.xlu0
        %v409 = vpop.trf.xlu0
        %v410 = vpop.trf.xlu0
        %v411 = vpop.trf.xlu0
        %v412 = vpop.trf.xlu0
        %v413 = vpop.trf.xlu0
        %v414 = vpop.trf.xlu0
        %v415 = vpop.trf.xlu0
        %416 = vxpose.xlu0.b32.start [1/16] %v315, 128
        %417 = vxpose.xlu0.b32.cont [2/16] 0.0, 128
        %418 = vxpose.xlu0.b32.cont [3/16] 0.0, 128
        %419 = vxpose.xlu0.b32.cont [4/16] 0.0, 128
        %420 = vxpose.xlu0.b32.cont [5/16] 0.0, 128
        %421 = vxpose.xlu0.b32.cont [6/16] 0.0, 128
        %422 = vxpose.xlu0.b32.cont [7/16] 0.0, 128
        %423 = vxpose.xlu0.b32.cont [8/16] 0.0, 128
        %424 = vxpose.xlu0.b32.cont [9/16] 0.0, 128
        %425 = vxpose.xlu0.b32.cont [10/16] 0.0, 128
        %426 = vxpose.xlu0.b32.cont [11/16] 0.0, 128
        %427 = vxpose.xlu0.b32.cont [12/16] 0.0, 128
        %428 = vxpose.xlu0.b32.cont [13/16] 0.0, 128
        %429 = vxpose.xlu0.b32.cont [14/16] 0.0, 128
        %430 = vxpose.xlu0.b32.cont [15/16] 0.0, 128
        %431 = vxpose.xlu0.b32.end [16/16] 0.0, 128
        %v432 = vpop.trf.xlu0
        %v433 = vpop.trf.xlu0
        %v434 = vpop.trf.xlu0
        %v435 = vpop.trf.xlu0
        %v436 = vpop.trf.xlu0
        %v437 = vpop.trf.xlu0
        %v438 = vpop.trf.xlu0
        %v439 = vpop.trf.xlu0
        %v440 = vpop.trf.xlu0
        %v441 = vpop.trf.xlu0
        %v442 = vpop.trf.xlu0
        %v443 = vpop.trf.xlu0
        %v444 = vpop.trf.xlu0
        %v445 = vpop.trf.xlu0
        %v446 = vpop.trf.xlu0
        %v447 = vpop.trf.xlu0
        %vm448 = vcmask 64512
        %v449 = vsel %vm448, %v299, 0
        %451 = vmatpush.msra.mxu0 0.0
        %452 = vmatpush.msra.mxu0 0.0
        %453 = vmatpush.msra.mxu0 0.0
        %454 = vmatpush.msra.mxu0 0.0
        %455 = vmatpush.msra.mxu0 0.0
        %456 = vmatpush.msra.mxu0 0.0
        %457 = vmatpush.msra.mxu0 0.0
        %458 = vmatpush.msra.mxu0 0.0
        %459 = vmatpush.msra.mxu0 0.0
        %460 = vmatpush.msra.mxu0 0.0
        %461 = vmatpush.msra.mxu0 0.0
        %462 = vmatpush.msra.mxu0 0.0
        %463 = vmatpush.msra.mxu0 0.0
        %464 = vmatpush.msra.mxu0 0.0
        %465 = vmatpush.msra.mxu0 0.0
        %466 = vmatpush.msra.mxu0 %v336
        %467 = vmatmul.f32.gmra.mxu0 %v449
        %v468 = vpop.f32.mrf.mxu0
        %v469 = vadd.f32 0.0, %v468
        %470 = vdwg.mxu0
        %v471 = vsel %vm448, %v303, 0
        %473 = vmatpush.msra.mxu0 0.0
        %474 = vmatpush.msra.mxu0 0.0
        %475 = vmatpush.msra.mxu0 0.0
        %476 = vmatpush.msra.mxu0 0.0
        %477 = vmatpush.msra.mxu0 0.0
        %478 = vmatpush.msra.mxu0 0.0
        %479 = vmatpush.msra.mxu0 0.0
        %480 = vmatpush.msra.mxu0 0.0
        %481 = vmatpush.msra.mxu0 0.0
        %482 = vmatpush.msra.mxu0 0.0
        %483 = vmatpush.msra.mxu0 0.0
        %484 = vmatpush.msra.mxu0 0.0
        %485 = vmatpush.msra.mxu0 0.0
        %486 = vmatpush.msra.mxu0 0.0
        %487 = vmatpush.msra.mxu0 0.0
        %488 = vmatpush.msra.mxu0 %v368
        %489 = vmatmul.f32.gmra.mxu0 %v471
        %v490 = vpop.f32.mrf.mxu0
        %v491 = vadd.f32 0.0, %v490
        %492 = vdwg.mxu0
        %v493 = vsel %vm448, %v305, 0
        %495 = vmatpush.msra.mxu0 0.0
        %496 = vmatpush.msra.mxu0 0.0
        %497 = vmatpush.msra.mxu0 0.0
        %498 = vmatpush.msra.mxu0 0.0
        %499 = vmatpush.msra.mxu0 0.0
        %500 = vmatpush.msra.mxu0 0.0
        %501 = vmatpush.msra.mxu0 0.0
        %502 = vmatpush.msra.mxu0 0.0
        %503 = vmatpush.msra.mxu0 0.0
        %504 = vmatpush.msra.mxu0 0.0
        %505 = vmatpush.msra.mxu0 0.0
        %506 = vmatpush.msra.mxu0 0.0
        %507 = vmatpush.msra.mxu0 0.0
        %508 = vmatpush.msra.mxu0 0.0
        %509 = vmatpush.msra.mxu0 0.0
        %510 = vmatpush.msra.mxu0 %v400
        %511 = vmatmul.f32.gmra.mxu0 %v493
        %v512 = vpop.f32.mrf.mxu0
        %v513 = vadd.f32 0.0, %v512
        %514 = vdwg.mxu0
        %v515 = vsel %vm448, %v307, 0
        %517 = vmatpush.msra.mxu0 0.0
        %518 = vmatpush.msra.mxu0 0.0
        %519 = vmatpush.msra.mxu0 0.0
        %520 = vmatpush.msra.mxu0 0.0
        %521 = vmatpush.msra.mxu0 0.0
        %522 = vmatpush.msra.mxu0 0.0
        %523 = vmatpush.msra.mxu0 0.0
        %524 = vmatpush.msra.mxu0 0.0
        %525 = vmatpush.msra.mxu0 0.0
        %526 = vmatpush.msra.mxu0 0.0
        %527 = vmatpush.msra.mxu0 0.0
        %528 = vmatpush.msra.mxu0 0.0
        %529 = vmatpush.msra.mxu0 0.0
        %530 = vmatpush.msra.mxu0 0.0
        %531 = vmatpush.msra.mxu0 0.0
        %532 = vmatpush.msra.mxu0 %v432
        %533 = vmatmul.f32.gmra.mxu0 %v515
        %v534 = vpop.f32.mrf.mxu0
        %v535 = vadd.f32 0.0, %v534
        %536 = vdwg.mxu0
        %v537 = vmul.f32 %v469, 0.35355338
        %v538 = vmul.f32 %v491, 0.35355338
        %v539 = vmul.f32 %v513, 0.35355338
        %v540 = vmul.f32 %v535, 0.35355338
        %v541 = vld [vmem:[%s237] sm:$0xff]
        %v542 = vadd.f32 %v537, %v541
        %v543 = vadd.f32 %v538, %v541
        %v544 = vadd.f32 %v539, %v541
        %v545 = vadd.f32 %v540, %v541
        %v546 = vsel %vm448, %v542, -inf
        %547 = vmax.xlane.f32.xlu0 %v546
        %v548 = vpop.xlane.xlu0 %547
        %v549 = vsel %vm448, %v543, -inf
        %550 = vmax.xlane.f32.xlu0 %v549
        %v551 = vpop.xlane.xlu0 %550
        %v552 = vsel %vm448, %v544, -inf
        %553 = vmax.xlane.f32.xlu0 %v552
        %v554 = vpop.xlane.xlu0 %553
        %v555 = vsel %vm448, %v545, -inf
        %556 = vmax.xlane.f32.xlu0 %v555
        %v557 = vpop.xlane.xlu0 %556
        %v558 = vsub.f32 %v542, %v548
        %v559 = vsub.f32 %v543, %v551
        %v560 = vsub.f32 %v544, %v554
        %v561 = vsub.f32 %v545, %v557
        %v562 = vmul.f32 %v558, 1.442695
        %v563 = vpow.pop %v562
        %v564 = vmul.f32 %v559, 1.442695
        %v565 = vpow.pop %v564
        %v566 = vmul.f32 %v560, 1.442695
        %v567 = vpow.pop %v566
        %v568 = vmul.f32 %v561, 1.442695
        %v569 = vpow.pop %v568
        %v570 = vsel %vm448, %v563, 0.0
        %571 = vadd.xlane.f32.xlu0 %v570
        %v572 = vpop.xlane.xlu0 %571
        %v573 = vsel %vm448, %v565, 0.0
        %574 = vadd.xlane.f32.xlu0 %v573
        %v575 = vpop.xlane.xlu0 %574
        %v576 = vsel %vm448, %v567, 0.0
        %577 = vadd.xlane.f32.xlu0 %v576
        %v578 = vpop.xlane.xlu0 %577
        %v579 = vsel %vm448, %v569, 0.0
        %580 = vadd.xlane.f32.xlu0 %v579
        %v581 = vpop.xlane.xlu0 %580
        %v582 = vrcp.pop %v572
        %v583 = vrcp.pop %v575
        %v584 = vrcp.pop %v578
        %v585 = vrcp.pop %v581
        %v586 = vmul.f32 %v563, %v582
        %v587 = vmul.f32 %v565, %v583
        %v588 = vmul.f32 %v567, %v584
        %v589 = vmul.f32 %v569, %v585
        %590 = vrot.lane.b32.xlu0 %v299, 64
        %v591 = vpop.permute.xlu0 %590
        %592 = vrot.lane.b32.xlu0 %v303, 64
        %v593 = vpop.permute.xlu0 %592
        %594 = vrot.lane.b32.xlu0 %v305, 64
        %v595 = vpop.permute.xlu0 %594
        %596 = vrot.lane.b32.xlu0 %v307, 64
        %v597 = vpop.permute.xlu0 %596
        %602 = vxpose.xlu0.b32.start [1/16] %v591, 128
        %603 = vxpose.xlu0.b32.cont [2/16] 0.0, 128
        %604 = vxpose.xlu0.b32.cont [3/16] 0.0, 128
        %605 = vxpose.xlu0.b32.cont [4/16] 0.0, 128
        %606 = vxpose.xlu0.b32.cont [5/16] 0.0, 128
        %607 = vxpose.xlu0.b32.cont [6/16] 0.0, 128
        %608 = vxpose.xlu0.b32.cont [7/16] 0.0, 128
        %609 = vxpose.xlu0.b32.cont [8/16] 0.0, 128
        %610 = vxpose.xlu0.b32.cont [9/16] 0.0, 128
        %611 = vxpose.xlu0.b32.cont [10/16] 0.0, 128
        %612 = vxpose.xlu0.b32.cont [11/16] 0.0, 128
        %613 = vxpose.xlu0.b32.cont [12/16] 0.0, 128
        %614 = vxpose.xlu0.b32.cont [13/16] 0.0, 128
        %615 = vxpose.xlu0.b32.cont [14/16] 0.0, 128
        %616 = vxpose.xlu0.b32.cont [15/16] 0.0, 128
        %617 = vxpose.xlu0.b32.end [16/16] 0.0, 128
        %v618 = vpop.trf.xlu0
        %v619 = vpop.trf.xlu0
        %v620 = vpop.trf.xlu0
        %v621 = vpop.trf.xlu0
        %v622 = vpop.trf.xlu0
        %v623 = vpop.trf.xlu0
        %v624 = vpop.trf.xlu0
        %v625 = vpop.trf.xlu0
        %v626 = vpop.trf.xlu0
        %v627 = vpop.trf.xlu0
        %v628 = vpop.trf.xlu0
        %v629 = vpop.trf.xlu0
        %v630 = vpop.trf.xlu0
        %v631 = vpop.trf.xlu0
        %v632 = vpop.trf.xlu0
        %v633 = vpop.trf.xlu0
        %634 = vxpose.xlu0.b32.start [1/16] %v593, 128
        %635 = vxpose.xlu0.b32.cont [2/16] 0.0, 128
        %636 = vxpose.xlu0.b32.cont [3/16] 0.0, 128
        %637 = vxpose.xlu0.b32.cont [4/16] 0.0, 128
        %638 = vxpose.xlu0.b32.cont [5/16] 0.0, 128
        %639 = vxpose.xlu0.b32.cont [6/16] 0.0, 128
        %640 = vxpose.xlu0.b32.cont [7/16] 0.0, 128
        %641 = vxpose.xlu0.b32.cont [8/16] 0.0, 128
        %642 = vxpose.xlu0.b32.cont [9/16] 0.0, 128
        %643 = vxpose.xlu0.b32.cont [10/16] 0.0, 128
        %644 = vxpose.xlu0.b32.cont [11/16] 0.0, 128
        %645 = vxpose.xlu0.b32.cont [12/16] 0.0, 128
        %646 = vxpose.xlu0.b32.cont [13/16] 0.0, 128
        %647 = vxpose.xlu0.b32.cont [14/16] 0.0, 128
        %648 = vxpose.xlu0.b32.cont [15/16] 0.0, 128
        %649 = vxpose.xlu0.b32.end [16/16] 0.0, 128
        %v650 = vpop.trf.xlu0
        %v651 = vpop.trf.xlu0
        %v652 = vpop.trf.xlu0
        %v653 = vpop.trf.xlu0
        %v654 = vpop.trf.xlu0
        %v655 = vpop.trf.xlu0
        %v656 = vpop.trf.xlu0
        %v657 = vpop.trf.xlu0
        %v658 = vpop.trf.xlu0
        %v659 = vpop.trf.xlu0
        %v660 = vpop.trf.xlu0
        %v661 = vpop.trf.xlu0
        %v662 = vpop.trf.xlu0
        %v663 = vpop.trf.xlu0
        %v664 = vpop.trf.xlu0
        %v665 = vpop.trf.xlu0
        %666 = vxpose.xlu0.b32.start [1/16] %v595, 128
        %667 = vxpose.xlu0.b32.cont [2/16] 0.0, 128
        %668 = vxpose.xlu0.b32.cont [3/16] 0.0, 128
        %669 = vxpose.xlu0.b32.cont [4/16] 0.0, 128
        %670 = vxpose.xlu0.b32.cont [5/16] 0.0, 128
        %671 = vxpose.xlu0.b32.cont [6/16] 0.0, 128
        %672 = vxpose.xlu0.b32.cont [7/16] 0.0, 128
        %673 = vxpose.xlu0.b32.cont [8/16] 0.0, 128
        %674 = vxpose.xlu0.b32.cont [9/16] 0.0, 128
        %675 = vxpose.xlu0.b32.cont [10/16] 0.0, 128
        %676 = vxpose.xlu0.b32.cont [11/16] 0.0, 128
        %677 = vxpose.xlu0.b32.cont [12/16] 0.0, 128
        %678 = vxpose.xlu0.b32.cont [13/16] 0.0, 128
        %679 = vxpose.xlu0.b32.cont [14/16] 0.0, 128
        %680 = vxpose.xlu0.b32.cont [15/16] 0.0, 128
        %681 = vxpose.xlu0.b32.end [16/16] 0.0, 128
        %v682 = vpop.trf.xlu0
        %v683 = vpop.trf.xlu0
        %v684 = vpop.trf.xlu0
        %v685 = vpop.trf.xlu0
        %v686 = vpop.trf.xlu0
        %v687 = vpop.trf.xlu0
        %v688 = vpop.trf.xlu0
        %v689 = vpop.trf.xlu0
        %v690 = vpop.trf.xlu0
        %v691 = vpop.trf.xlu0
        %v692 = vpop.trf.xlu0
        %v693 = vpop.trf.xlu0
        %v694 = vpop.trf.xlu0
        %v695 = vpop.trf.xlu0
        %v696 = vpop.trf.xlu0
        %v697 = vpop.trf.xlu0
        %698 = vxpose.xlu0.b32.start [1/16] %v597, 128
        %699 = vxpose.xlu0.b32.cont [2/16] 0.0, 128
        %700 = vxpose.xlu0.b32.cont [3/16] 0.0, 128
        %701 = vxpose.xlu0.b32.cont [4/16] 0.0, 128
        %702 = vxpose.xlu0.b32.cont [5/16] 0.0, 128
        %703 = vxpose.xlu0.b32.cont [6/16] 0.0, 128
        %704 = vxpose.xlu0.b32.cont [7/16] 0.0, 128
        %705 = vxpose.xlu0.b32.cont [8/16] 0.0, 128
        %706 = vxpose.xlu0.b32.cont [9/16] 0.0, 128
        %707 = vxpose.xlu0.b32.cont [10/16] 0.0, 128
        %708 = vxpose.xlu0.b32.cont [11/16] 0.0, 128
        %709 = vxpose.xlu0.b32.cont [12/16] 0.0, 128
        %710 = vxpose.xlu0.b32.cont [13/16] 0.0, 128
        %711 = vxpose.xlu0.b32.cont [14/16] 0.0, 128
        %712 = vxpose.xlu0.b32.cont [15/16] 0.0, 128
        %713 = vxpose.xlu0.b32.end [16/16] 0.0, 128
        %v714 = vpop.trf.xlu0
        %v715 = vpop.trf.xlu0
        %v716 = vpop.trf.xlu0
        %v717 = vpop.trf.xlu0
        %v718 = vpop.trf.xlu0
        %v719 = vpop.trf.xlu0
        %v720 = vpop.trf.xlu0
        %v721 = vpop.trf.xlu0
        %v722 = vpop.trf.xlu0
        %v723 = vpop.trf.xlu0
        %v724 = vpop.trf.xlu0
        %v725 = vpop.trf.xlu0
        %v726 = vpop.trf.xlu0
        %v727 = vpop.trf.xlu0
        %v728 = vpop.trf.xlu0
        %v729 = vpop.trf.xlu0
        %v731 = vsel %vm448, %v618, 0
        %v734 = vsel %vm448, %v586, 0
        %736 = vmatpush.xpose.msra.mxu0 0.0
        %737 = vmatpush.xpose.msra.mxu0 0.0
        %738 = vmatpush.xpose.msra.mxu0 0.0
        %739 = vmatpush.xpose.msra.mxu0 0.0
        %740 = vmatpush.xpose.msra.mxu0 0.0
        %741 = vmatpush.xpose.msra.mxu0 0.0
        %742 = vmatpush.xpose.msra.mxu0 0.0
        %743 = vmatpush.xpose.msra.mxu0 0.0
        %744 = vmatpush.xpose.msra.mxu0 0.0
        %745 = vmatpush.xpose.msra.mxu0 0.0
        %746 = vmatpush.xpose.msra.mxu0 0.0
        %747 = vmatpush.xpose.msra.mxu0 0.0
        %748 = vmatpush.xpose.msra.mxu0 0.0
        %749 = vmatpush.xpose.msra.mxu0 0.0
        %750 = vmatpush.xpose.msra.mxu0 0.0
        %751 = vmatpush.xpose.msra.mxu0 %v734
        %752 = vmatmul.f32.gmra.mxu0 %v731
        %v753 = vpop.f32.mrf.mxu0
        %v754 = vadd.f32 0.0, %v753
        %755 = vdwg.mxu0
        %v757 = vsel %vm448, %v650, 0
        %v760 = vsel %vm448, %v587, 0
        %762 = vmatpush.xpose.msra.mxu0 0.0
        %763 = vmatpush.xpose.msra.mxu0 0.0
        %764 = vmatpush.xpose.msra.mxu0 0.0
        %765 = vmatpush.xpose.msra.mxu0 0.0
        %766 = vmatpush.xpose.msra.mxu0 0.0
        %767 = vmatpush.xpose.msra.mxu0 0.0
        %768 = vmatpush.xpose.msra.mxu0 0.0
        %769 = vmatpush.xpose.msra.mxu0 0.0
        %770 = vmatpush.xpose.msra.mxu0 0.0
        %771 = vmatpush.xpose.msra.mxu0 0.0
        %772 = vmatpush.xpose.msra.mxu0 0.0
        %773 = vmatpush.xpose.msra.mxu0 0.0
        %774 = vmatpush.xpose.msra.mxu0 0.0
        %775 = vmatpush.xpose.msra.mxu0 0.0
        %776 = vmatpush.xpose.msra.mxu0 0.0
        %777 = vmatpush.xpose.msra.mxu0 %v760
        %778 = vmatmul.f32.gmra.mxu0 %v757
        %v779 = vpop.f32.mrf.mxu0
        %v780 = vadd.f32 0.0, %v779
        %781 = vdwg.mxu0
        %v783 = vsel %vm448, %v682, 0
        %v786 = vsel %vm448, %v588, 0
        %788 = vmatpush.xpose.msra.mxu0 0.0
        %789 = vmatpush.xpose.msra.mxu0 0.0
        %790 = vmatpush.xpose.msra.mxu0 0.0
        %791 = vmatpush.xpose.msra.mxu0 0.0
        %792 = vmatpush.xpose.msra.mxu0 0.0
        %793 = vmatpush.xpose.msra.mxu0 0.0
        %794 = vmatpush.xpose.msra.mxu0 0.0
        %795 = vmatpush.xpose.msra.mxu0 0.0
        %796 = vmatpush.xpose.msra.mxu0 0.0
        %797 = vmatpush.xpose.msra.mxu0 0.0
        %798 = vmatpush.xpose.msra.mxu0 0.0
        %799 = vmatpush.xpose.msra.mxu0 0.0
        %800 = vmatpush.xpose.msra.mxu0 0.0
        %801 = vmatpush.xpose.msra.mxu0 0.0
        %802 = vmatpush.xpose.msra.mxu0 0.0
        %803 = vmatpush.xpose.msra.mxu0 %v786
        %804 = vmatmul.f32.gmra.mxu0 %v783
        %v805 = vpop.f32.mrf.mxu0
        %v806 = vadd.f32 0.0, %v805
        %807 = vdwg.mxu0
        %v809 = vsel %vm448, %v714, 0
        %v812 = vsel %vm448, %v589, 0
        %814 = vmatpush.xpose.msra.mxu0 0.0
        %815 = vmatpush.xpose.msra.mxu0 0.0
        %816 = vmatpush.xpose.msra.mxu0 0.0
        %817 = vmatpush.xpose.msra.mxu0 0.0
        %818 = vmatpush.xpose.msra.mxu0 0.0
        %819 = vmatpush.xpose.msra.mxu0 0.0
        %820 = vmatpush.xpose.msra.mxu0 0.0
        %821 = vmatpush.xpose.msra.mxu0 0.0
        %822 = vmatpush.xpose.msra.mxu0 0.0
        %823 = vmatpush.xpose.msra.mxu0 0.0
        %824 = vmatpush.xpose.msra.mxu0 0.0
        %825 = vmatpush.xpose.msra.mxu0 0.0
        %826 = vmatpush.xpose.msra.mxu0 0.0
        %827 = vmatpush.xpose.msra.mxu0 0.0
        %828 = vmatpush.xpose.msra.mxu0 0.0
        %829 = vmatpush.xpose.msra.mxu0 %v812
        %830 = vmatmul.f32.gmra.mxu0 %v809
        %v831 = vpop.f32.mrf.mxu0
        %v832 = vadd.f32 0.0, %v831
        %833 = vdwg.mxu0
        %834 = vxpose.xlu0.b32.start [1/16] %v754, 128
        %835 = vxpose.xlu0.b32.cont [2/16] 0.0, 128
        %836 = vxpose.xlu0.b32.cont [3/16] 0.0, 128
        %837 = vxpose.xlu0.b32.cont [4/16] 0.0, 128
        %838 = vxpose.xlu0.b32.cont [5/16] 0.0, 128
        %839 = vxpose.xlu0.b32.cont [6/16] 0.0, 128
        %840 = vxpose.xlu0.b32.cont [7/16] 0.0, 128
        %841 = vxpose.xlu0.b32.cont [8/16] 0.0, 128
        %842 = vxpose.xlu0.b32.cont [9/16] 0.0, 128
        %843 = vxpose.xlu0.b32.cont [10/16] 0.0, 128
        %844 = vxpose.xlu0.b32.cont [11/16] 0.0, 128
        %845 = vxpose.xlu0.b32.cont [12/16] 0.0, 128
        %846 = vxpose.xlu0.b32.cont [13/16] 0.0, 128
        %847 = vxpose.xlu0.b32.cont [14/16] 0.0, 128
        %848 = vxpose.xlu0.b32.cont [15/16] 0.0, 128
        %849 = vxpose.xlu0.b32.end [16/16] 0.0, 128
        %v850 = vpop.trf.xlu0
        %v851 = vpop.trf.xlu0
        %v852 = vpop.trf.xlu0
        %v853 = vpop.trf.xlu0
        %v854 = vpop.trf.xlu0
        %v855 = vpop.trf.xlu0
        %v856 = vpop.trf.xlu0
        %v857 = vpop.trf.xlu0
        %v858 = vpop.trf.xlu0
        %v859 = vpop.trf.xlu0
        %v860 = vpop.trf.xlu0
        %v861 = vpop.trf.xlu0
        %v862 = vpop.trf.xlu0
        %v863 = vpop.trf.xlu0
        %v864 = vpop.trf.xlu0
        %v865 = vpop.trf.xlu0
        %866 = vxpose.xlu0.b32.start [1/16] %v780, 128
        %867 = vxpose.xlu0.b32.cont [2/16] 0.0, 128
        %868 = vxpose.xlu0.b32.cont [3/16] 0.0, 128
        %869 = vxpose.xlu0.b32.cont [4/16] 0.0, 128
        %870 = vxpose.xlu0.b32.cont [5/16] 0.0, 128
        %871 = vxpose.xlu0.b32.cont [6/16] 0.0, 128
        %872 = vxpose.xlu0.b32.cont [7/16] 0.0, 128
        %873 = vxpose.xlu0.b32.cont [8/16] 0.0, 128
        %874 = vxpose.xlu0.b32.cont [9/16] 0.0, 128
        %875 = vxpose.xlu0.b32.cont [10/16] 0.0, 128
        %876 = vxpose.xlu0.b32.cont [11/16] 0.0, 128
        %877 = vxpose.xlu0.b32.cont [12/16] 0.0, 128
        %878 = vxpose.xlu0.b32.cont [13/16] 0.0, 128
        %879 = vxpose.xlu0.b32.cont [14/16] 0.0, 128
        %880 = vxpose.xlu0.b32.cont [15/16] 0.0, 128
        %881 = vxpose.xlu0.b32.end [16/16] 0.0, 128
        %v882 = vpop.trf.xlu0
        %v883 = vpop.trf.xlu0
        %v884 = vpop.trf.xlu0
        %v885 = vpop.trf.xlu0
        %v886 = vpop.trf.xlu0
        %v887 = vpop.trf.xlu0
        %v888 = vpop.trf.xlu0
        %v889 = vpop.trf.xlu0
        %v890 = vpop.trf.xlu0
        %v891 = vpop.trf.xlu0
        %v892 = vpop.trf.xlu0
        %v893 = vpop.trf.xlu0
        %v894 = vpop.trf.xlu0
        %v895 = vpop.trf.xlu0
        %v896 = vpop.trf.xlu0
        %v897 = vpop.trf.xlu0
        %898 = vxpose.xlu0.b32.start [1/16] %v806, 128
        %899 = vxpose.xlu0.b32.cont [2/16] 0.0, 128
        %900 = vxpose.xlu0.b32.cont [3/16] 0.0, 128
        %901 = vxpose.xlu0.b32.cont [4/16] 0.0, 128
        %902 = vxpose.xlu0.b32.cont [5/16] 0.0, 128
        %903 = vxpose.xlu0.b32.cont [6/16] 0.0, 128
        %904 = vxpose.xlu0.b32.cont [7/16] 0.0, 128
        %905 = vxpose.xlu0.b32.cont [8/16] 0.0, 128
        %906 = vxpose.xlu0.b32.cont [9/16] 0.0, 128
        %907 = vxpose.xlu0.b32.cont [10/16] 0.0, 128
        %908 = vxpose.xlu0.b32.cont [11/16] 0.0, 128
        %909 = vxpose.xlu0.b32.cont [12/16] 0.0, 128
        %910 = vxpose.xlu0.b32.cont [13/16] 0.0, 128
        %911 = vxpose.xlu0.b32.cont [14/16] 0.0, 128
        %912 = vxpose.xlu0.b32.cont [15/16] 0.0, 128
        %913 = vxpose.xlu0.b32.end [16/16] 0.0, 128
        %v914 = vpop.trf.xlu0
        %v915 = vpop.trf.xlu0
        %v916 = vpop.trf.xlu0
        %v917 = vpop.trf.xlu0
        %v918 = vpop.trf.xlu0
        %v919 = vpop.trf.xlu0
        %v920 = vpop.trf.xlu0
        %v921 = vpop.trf.xlu0
        %v922 = vpop.trf.xlu0
        %v923 = vpop.trf.xlu0
        %v924 = vpop.trf.xlu0
        %v925 = vpop.trf.xlu0
        %v926 = vpop.trf.xlu0
        %v927 = vpop.trf.xlu0
        %v928 = vpop.trf.xlu0
        %v929 = vpop.trf.xlu0
        %930 = vxpose.xlu0.b32.start [1/16] %v832, 128
        %931 = vxpose.xlu0.b32.cont [2/16] 0.0, 128
        %932 = vxpose.xlu0.b32.cont [3/16] 0.0, 128
        %933 = vxpose.xlu0.b32.cont [4/16] 0.0, 128
        %934 = vxpose.xlu0.b32.cont [5/16] 0.0, 128
        %935 = vxpose.xlu0.b32.cont [6/16] 0.0, 128
        %936 = vxpose.xlu0.b32.cont [7/16] 0.0, 128
        %937 = vxpose.xlu0.b32.cont [8/16] 0.0, 128
        %938 = vxpose.xlu0.b32.cont [9/16] 0.0, 128
        %939 = vxpose.xlu0.b32.cont [10/16] 0.0, 128
        %940 = vxpose.xlu0.b32.cont [11/16] 0.0, 128
        %941 = vxpose.xlu0.b32.cont [12/16] 0.0, 128
        %942 = vxpose.xlu0.b32.cont [13/16] 0.0, 128
        %943 = vxpose.xlu0.b32.cont [14/16] 0.0, 128
        %944 = vxpose.xlu0.b32.cont [15/16] 0.0, 128
        %945 = vxpose.xlu0.b32.end [16/16] 0.0, 128
        %v946 = vpop.trf.xlu0
        %v947 = vpop.trf.xlu0
        %v948 = vpop.trf.xlu0
        %v949 = vpop.trf.xlu0
        %v950 = vpop.trf.xlu0
        %v951 = vpop.trf.xlu0
        %v952 = vpop.trf.xlu0
        %v953 = vpop.trf.xlu0
        %v954 = vpop.trf.xlu0
        %v955 = vpop.trf.xlu0
        %v956 = vpop.trf.xlu0
        %v957 = vpop.trf.xlu0
        %v958 = vpop.trf.xlu0
        %v959 = vpop.trf.xlu0
        %v960 = vpop.trf.xlu0
        %v961 = vpop.trf.xlu0
        %v962 = vrot.slane %v914, 4
        %vm963 = vcmask 1047556
        %v964 = vsel %vm963, %v962, %v850
        %v965 = vrot.slane %v850, 4
        %v966 = vsel %vm963, %v914, %v965
        %v968 = vunpack.c.l.s4 1983009808
        %v969 = vunpack.c.0.s8 %v968
        %v970 = vperm.slane %v964, %v969
        %v972 = vunpack.c.l.s4 1983009808
        %v973 = vunpack.c.0.s8 %v972
        %v974 = vperm.slane %v966, %v973
        %v975 = vrot.slane %v946, 4
        %v976 = vsel %vm963, %v975, %v882
        %v977 = vrot.slane %v882, 4
        %v978 = vsel %vm963, %v946, %v977
        %v980 = vunpack.c.l.s4 1983009808
        %v981 = vunpack.c.0.s8 %v980
        %v982 = vperm.slane %v976, %v981
        %v984 = vunpack.c.l.s4 1983009808
        %v985 = vunpack.c.0.s8 %v984
        %v986 = vperm.slane %v978, %v985
        %v987 = vrot.slane %v982, 4
        %v988 = vsel %vm963, %v987, %v970
        %v989 = vrot.slane %v970, 4
        %v990 = vsel %vm963, %v982, %v989
        %v992 = vunpack.c.l.s4 1934713408
        %v993 = vunpack.c.0.s8 %v992
        %v994 = vperm.slane %v988, %v993
        %v996 = vunpack.c.l.s4 1934713408
        %v997 = vunpack.c.0.s8 %v996
        %v998 = vperm.slane %v990, %v997
        %v999 = vrot.slane %v986, 4
        %v1000 = vsel %vm963, %v999, %v974
        %v1001 = vrot.slane %v974, 4
        %v1002 = vsel %vm963, %v986, %v1001
        %v1004 = vunpack.c.l.s4 1934713408
        %v1005 = vunpack.c.0.s8 %v1004
        %v1006 = vperm.slane %v1000, %v1005
        %v1008 = vunpack.c.l.s4 1934713408
        %v1009 = vunpack.c.0.s8 %v1008
        %v1010 = vperm.slane %v1002, %v1009
        %v1011 = vrot.slane %v994, 4
        %v1012 = vsel %vm963, 0.0, %v1011
        %v1013 = vrot.slane %v998, 4
        %v1014 = vsel %vm963, 0.0, %v1013
        %v1015 = vrot.slane %v1006, 4
        %v1016 = vsel %vm963, 0.0, %v1015
        %v1017 = vrot.slane %v1010, 4
        %v1018 = vsel %vm963, 0.0, %v1017
        %v1019 = vsel %vm963, %v1013, %v994
        %v1021 = vunpack.c.l.s4 1983009808
        %v1022 = vunpack.c.0.s8 %v1021
        %v1023 = vperm.slane %v1019, %v1022
        %v1024 = vrot.slane %v1014, 4
        %v1025 = vsel %vm963, %v1024, %v1012
        %v1027 = vunpack.c.l.s4 1983009808
        %v1028 = vunpack.c.0.s8 %v1027
        %v1029 = vperm.slane %v1025, %v1028
        %v1030 = vsel %vm963, %v1017, %v1006
        %v1032 = vunpack.c.l.s4 1983009808
        %v1033 = vunpack.c.0.s8 %v1032
        %v1034 = vperm.slane %v1030, %v1033
        %v1035 = vrot.slane %v1018, 4
        %v1036 = vsel %vm963, %v1035, %v1016
        %v1038 = vunpack.c.l.s4 1983009808
        %v1039 = vunpack.c.0.s8 %v1038
        %v1040 = vperm.slane %v1036, %v1039
        %v1041 = vrot.slane %v1029, 4
        %v1042 = vsel %vm963, %v1041, %v1023
        %v1043 = vrot.slane %v1023, 4
        %v1044 = vsel %vm963, %v1029, %v1043
        %v1046 = vunpack.c.l.s4 1934713408
        %v1047 = vunpack.c.0.s8 %v1046
        %v1048 = vperm.slane %v1042, %v1047
        %v1050 = vunpack.c.l.s4 1934713408
        %v1051 = vunpack.c.0.s8 %v1050
        %v1052 = vperm.slane %v1044, %v1051
        %v1053 = vrot.slane %v1040, 4
        %v1054 = vsel %vm963, %v1053, %v1034
        %v1055 = vrot.slane %v1034, 4
        %v1056 = vsel %vm963, %v1040, %v1055
        %v1058 = vunpack.c.l.s4 1934713408
        %v1059 = vunpack.c.0.s8 %v1058
        %v1060 = vperm.slane %v1054, %v1059
        %v1062 = vunpack.c.l.s4 1934713408
        %v1063 = vunpack.c.0.s8 %v1062
        %v1064 = vperm.slane %v1056, %v1063
        %v1065 = vrot.slane %v1060, 4
        %v1066 = vsel %vm963, %v1065, %v1048
        %v1067 = vrot.slane %v1048, 4
        %v1068 = vsel %vm963, %v1060, %v1067
        %v1069 = vrot.slane %v1064, 4
        %v1070 = vsel %vm963, %v1069, %v1052
        %v1071 = vrot.slane %v1052, 4
        %v1072 = vsel %vm963, %v1064, %v1071
        %1074 = vrot.lane.b32.xlu0 %v1068, 8
        %v1075 = vpop.permute.xlu0 %1074
        %1078 = vrot.lane.b32.xlu0 %v1070, 16
        %v1079 = vpop.permute.xlu0 %1078
        %1082 = vrot.lane.b32.xlu0 %v1072, 24
        %v1083 = vpop.permute.xlu0 %1082
        %v1085 = vsel %vm448, %v1066, %v1075
        %vm1086 = vcmask 130048
        %v1087 = vsel %vm1086, %v1085, %v1079
        %vm1088 = vcmask 195584
        %v1089 = vsel %vm1088, %v1087, %v1083
        %1090 = vst.msk [vmem:[%s267] sm:$0xff] %vm277, %v1089
        %s1091 = sand.u32 %s124, 1
        %s1092 = scalar_lea.sflag [#allocation4], %s1091
        %s1093 = sand.u32 %s124, 1
        %s1094 = smul.addr %s1093, 8
        %s1095 = scalar_lea.vmem [#allocation8], %s1094
        // Predicated region
        $region49: #{tpu_custom_call.1} parent=35 // pred_check
          %p1096 = pneg %p134
        $region50: #{tpu_custom_call.1} parent=35 // pred_check_branch
          %1098 = sbr.rel (%p1096) target = $region52
        $region51: #{tpu_custom_call.1} parent=35 // pred_region
          %1100 = vsyncadd %s1092, 0
          %s1101 = smul.addr %s22, 8
          %s1102 = scalar_lea.hbm %s4, %s1101
          %s1104 = sshll.u32 %s1095, 4
          %s1105 = int_to_ptr.vmem [resolvable:$true] %s1104
          %s1106 = sshll.u32 %s1102, 4
          %s1107 = int_to_ptr.hbm [resolvable:$true] %s1106
          %1109 = dma.vmem_to_hbm [thread:$0]  %s1105, 128, %s1107, %s1092
        $region52: #{tpu_custom_call.1} parent=35 // pred_fallthru
          _
      $region36: #{tpu_custom_call.1} parent=5 // pred_fallthru
        _
      %p1110 = scmp.le.s32.totalorder 2, %s17
      // Predicated region
      $region53: #{tpu_custom_call.1} parent=5 // pred_check
        %p1111 = pneg %p1110
      $region54: #{tpu_custom_call.1} parent=5 // pred_check_branch
        %1113 = sbr.rel (%p1111) target = $region56
      $region55: #{tpu_custom_call.1} parent=5 // pred_region
        %s1114 = ssub.s32 %s17, 2
        // Predicated region
        $region57: #{tpu_custom_call.1} parent=55 // pred_check
          %p1115 = pneg %p140
        $region58: #{tpu_custom_call.1} parent=55 // pred_check_branch
          %1117 = sbr.rel (%p1115) target = $region60
        $region59: #{tpu_custom_call.1} parent=55 // pred_region
          %s1118 = sand.u32 %s125, 1
          %s1119 = scalar_lea.sflag [#allocation4], %s1118
          %s1120 = sand.u32 %s125, 1
          %s1121 = smul.addr %s1120, 8
          %s1122 = scalar_lea.vmem [#allocation8], %s1121
          %1124 = dma.done %s1119, 128
        $region60: #{tpu_custom_call.1} parent=55 // pred_fallthru
          _
      $region56: #{tpu_custom_call.1} parent=5 // pred_fallthru
        _
    $region6: #{tpu_custom_call.1} parent=1 // loop_footer
      %s21 = sadd.s32 1, %s17
    $region7: #{tpu_custom_call.1} parent=1 // loop_footer_branch
      %16 = sbr.rel target = $region3
    $region8: #{tpu_custom_call.1} parent=1 // loop_exit
      _
    %1125 = vsyncpa [#allocation3], 1
    %s1126 = scalar_lea.sflag [#allocation3], 1
    %1127 = vsyncpa %s1126, 1
    %1128 = vsyncpa [#allocation6], 1
    %1129 = vsyncpa [#allocation4], 1
    %s1130 = scalar_lea.sflag [#allocation4], 1
    %1131 = vsyncpa %s1130, 1

</llo_original>
